<compile_context>
chip_gen: v7x
topology: tpu7x:2x2x1
jax: 0.10.0
libtpu: 0.0.40
codegen_flags: <defaults>
</compile_context>

<pallas_src>
import functools

import jax
import jax.numpy as jnp
from jax.experimental import pallas as pl
from jax.experimental.pallas import tpu as pltpu


def _conv_bn_silu_kernel(x_ref, wb_ref, shift_ref, o_ref, xpad_ref,
                         *, K, H, W, C1, C2, TILE_H, PAD):
    """One (batch, H-tile) output block per grid step.

    x_ref:     (1, C1, H, W)        raw NCHW activation block (f32)
    wb_ref:    (K, C1*W, C2*W)      banded / BN-scaled conv weight (bf16)
    shift_ref: (1, C2*W)            folded BN shift, tiled c2-major (f32)
    o_ref:     (1, C2, TILE_H, W)   NCHW output block (f32)
    xpad_ref:  (H+2*PAD, C1*W)      H-padded, channel-interleaved scratch (f32)
    """
    h = pl.program_id(1)

    # Once per batch (h == 0): build the H-padded activation slab
    #   xpad[hp, c1*W + w] = x[n, c1, hp - PAD, w]   (zero outside the image).
    @pl.when(h == 0)
    def _():
        if PAD > 0:
            zeros = jnp.zeros((PAD, C1 * W), dtype=xpad_ref.dtype)
            xpad_ref[0:PAD, :] = zeros
            xpad_ref[H + PAD:H + 2 * PAD, :] = zeros
        for c1 in range(C1):
            xpad_ref[PAD:PAD + H, c1 * W:(c1 + 1) * W] = x_ref[0, c1, :, :]

    row0 = pl.multiple_of(h * TILE_H, TILE_H)

    # K matmuls over contraction (c1, w_in); output columns are (c2, w_out),
    # c2-major, so the result is lane-dense (C2*W lanes) straight off the MXU.
    acc = jnp.zeros((TILE_H, C2 * W), dtype=jnp.float32)
    for kh in range(K):
        lhs = xpad_ref[pl.ds(row0 + kh, TILE_H), :].astype(jnp.bfloat16)
        acc = acc + jnp.dot(lhs, wb_ref[kh], preferred_element_type=jnp.float32)

    # Folded BatchNorm (scale already inside the weight) + SiLU, in f32.
    y = acc + shift_ref[0]
    y = y * jax.nn.sigmoid(y)

    # Peel per-c2 lane slices straight into the NCHW output block
    # (no wrapper-side output transpose needed).
    for c2 in range(C2):
        o_ref[0, c2] = y[:, c2 * W:(c2 + 1) * W].astype(o_ref.dtype)


def _pick_tile_h(H, W, N):
    """TILE_H*W >= 256 when possible, divisor of H, >= 2 total grid steps."""
    t = min(H, max(1, -(-256 // W)))
    while H % t:
        t -= 1
    if N * (H // t) < 2:  # keep both v7x TensorCores busy when N == 1
        for cand in range(t - 1, 0, -1):
            if H % cand == 0 and H // cand >= 2:
                t = cand
                break
    return t


def conv_forward(x_nchw, weight_oihw, gamma, beta, running_mean, running_var,
                 eps=1e-5, tile_h=None):
    """Equivalent of Conv.forward(x) = SiLU(BN_eval(Conv2d(x)))  (s=1, g=1, d=1)."""
    N, C1, H, W = x_nchw.shape
    C2, C1w, K, K2 = weight_oihw.shape
    assert C1 == C1w and K == K2, "groups=1, square kernel, dilation=1 only"
    assert K % 2 == 1, "even kernel sizes need asymmetric SAME padding"
    p = K // 2  # autopad(k, None, d=1)

    TILE_H = tile_h if tile_h is not None else _pick_tile_h(H, W, N)
    assert H % TILE_H == 0
    HT = H // TILE_H

    # ---- host-side weight prep (tiny, done once; no activation traffic) ----
    inv_std = gamma / jnp.sqrt(running_var + eps)
    w_scaled = weight_oihw.astype(jnp.float32) * inv_std[:, None, None, None]

    # Banded (Toeplitz) weight:
    #   wb[kh, c1*W + w_in, c2*W + w_out] = w_scaled[c2, c1, kh, w_in - w_out + p]
    # when the tap lies inside the kernel window, else 0 (this also implements
    # the 'same' zero-padding along W).
    w_in = jnp.arange(W)[:, None]
    w_out = jnp.arange(W)[None, :]
    kw = w_in - w_out + p                                     # (W_in, W_out)
    valid = (kw >= 0) & (kw < K)
    band = w_scaled[:, :, :, jnp.clip(kw, 0, K - 1)]          # (C2,C1,K,Win,Wout)
    band = band * valid[None, None, None].astype(band.dtype)
    band = jnp.transpose(band, (2, 1, 3, 0, 4))               # (K,C1,Win,C2,Wout)
    wb = band.reshape(K, C1 * W, C2 * W).astype(jnp.bfloat16)

    shift = (beta - running_mean * inv_std).astype(jnp.float32)
    shift_tiled = jnp.repeat(shift, W).reshape(1, C2 * W)     # c2-major, matches wb cols

    kernel = functools.partial(_conv_bn_silu_kernel, K=K, H=H, W=W,
                               C1=C1, C2=C2, TILE_H=TILE_H, PAD=p)

    out = pl.pallas_call(
        kernel,
        out_shape=jax.ShapeDtypeStruct((N, C2, H, W), jnp.float32),
        grid_spec=pltpu.PrefetchScalarGridSpec(
            num_scalar_prefetch=0,
            grid=(N, HT),
            in_specs=[
                # Raw NCHW activation, whole image per batch (small here).
                pl.BlockSpec((1, C1, H, W), lambda n, h: (n, 0, 0, 0)),
                pl.BlockSpec((K, C1 * W, C2 * W), lambda n, h: (0, 0, 0)),
                pl.BlockSpec((1, C2 * W), lambda n, h: (0, 0)),
            ],
            out_specs=pl.BlockSpec((1, C2, TILE_H, W), lambda n, h: (n, 0, h, 0)),
            scratch_shapes=[pltpu.VMEM((H + 2 * p, C1 * W), jnp.float32)],
        ),
        compiler_params=pltpu.CompilerParams(
            # n-axis independent (megacore); h-axis carries the padded scratch.
            dimension_semantics=("parallel", "arbitrary"),
            # VMEM footprint here is ~0.1 MiB, well under the default scoped
            # limit; for large images raise vmem_limit_bytes on 128-MiB parts
            # (v5e/v6e) and cap ~48 MiB on v7x (64 MiB physical).
        ),
    )(x_nchw.astype(jnp.float32), wb, shift_tiled)
    return out


def _reference(x, w, gamma, beta, mean, var, eps=1e-5):
    """Pure-f32 JAX reference: conv2d + BN(eval) + SiLU in NCHW."""
    y = jax.lax.conv_general_dilated(
        x, w, window_strides=(1, 1), padding="SAME",
        dimension_numbers=("NCHW", "OIHW", "NCHW"))
    inv = gamma / jnp.sqrt(var + eps)
    y = y * inv.reshape(1, -1, 1, 1) + (beta - mean * inv).reshape(1, -1, 1, 1)
    return y * jax.nn.sigmoid(y)


if __name__ == "__main__":
    # Conv(c1=4, c2=8, k=3, s=1) on x: [2, 4, 16, 16]
    N, C1, C2, H, W, K = 2, 4, 8, 16, 16, 3

    key = jax.random.PRNGKey(0)
    k_x, k_w, k_g, k_b, k_m, k_v = jax.random.split(key, 6)

    x = jax.random.normal(k_x, (N, C1, H, W), dtype=jnp.float32)
    weight = jax.random.normal(k_w, (C2, C1, K, K), dtype=jnp.float32) * 0.1
    gamma = 1.0 + 0.1 * jax.random.normal(k_g, (C2,), dtype=jnp.float32)
    beta = 0.1 * jax.random.normal(k_b, (C2,), dtype=jnp.float32)
    running_mean = 0.1 * jax.random.normal(k_m, (C2,), dtype=jnp.float32)
    running_var = 1.0 + 0.1 * jnp.abs(jax.random.normal(k_v, (C2,), dtype=jnp.float32))

    out = conv_forward(x, weight, gamma, beta, running_mean, running_var)
    out = jax.block_until_ready(out)

    ref = _reference(x, weight, gamma, beta, running_mean, running_var)
    assert out.shape == (N, C2, H, W), out.shape
    max_err = float(jnp.max(jnp.abs(out - ref)))
    assert jnp.allclose(out, ref, atol=2e-2, rtol=2e-2), \
        f"mismatch vs f32 reference (max abs err {max_err})"

    print("KERNEL_OK")
</pallas_src>

<mosaic_0001>
module attributes {stable_mosaic.version = 11 : i64} {
  func.func @_conv_bn_silu_kernel(%arg0: i32, %arg1: i32, %arg2: memref<1x4x16x16xf32, #tpu.memory_space<vmem>>, %arg3: memref<3x64x128xbf16, #tpu.memory_space<vmem>>, %arg4: memref<1x128xf32, #tpu.memory_space<vmem>>, %arg5: memref<1x8x16x16xf32, #tpu.memory_space<vmem>>, %arg6: memref<18x64xf32, #tpu.memory_space<vmem>>) attributes {dimension_semantics = [#tpu.dimension_semantics<parallel>, #tpu.dimension_semantics<arbitrary>], iteration_bounds = array<i64: 2, 1>, scalar_prefetch = 0 : i64, scratch_operands = 1 : i64, tpu.core_type = #tpu.core_type<tc>, window_params = [{transform_indices = @transform_0, window_bounds = array<i64: 1, 4, 16, 16>}, {pipeline_mode = #tpu.pipeline_mode<synchronous>, transform_indices = @transform_1, window_bounds = array<i64: 3, 64, 128>}, {pipeline_mode = #tpu.pipeline_mode<synchronous>, transform_indices = @transform_2, window_bounds = array<i64: 1, 128>}, {transform_indices = @transform_3, window_bounds = array<i64: 1, 8, 16, 16>}]} {
    %c0_i32 = arith.constant 0 : i32
    %0 = arith.cmpi eq, %arg1, %c0_i32 : i32
    %1 = arith.extui %0 : i1 to i32
    %c0_i32_0 = arith.constant 0 : i32
    %2 = arith.cmpi ne, %1, %c0_i32_0 : i32
    scf.if %2 {
      %cst_44 = arith.constant 0.000000e+00 : f32
      %73 = vector.broadcast %cst_44 : f32 to vector<1x64xf32>
      %c0_45 = arith.constant 0 : index
      %c0_46 = arith.constant 0 : index
      %74 = vector.load %arg6[%c0_45, %c0_46] : memref<18x64xf32, #tpu.memory_space<vmem>>, vector<1x64xf32>
      tpu.vector_store %arg6[%c0_45, %c0_46], %73 {strides = array<i32>} : memref<18x64xf32, #tpu.memory_space<vmem>>, vector<1x64xf32>,
      %c17 = arith.constant 17 : index
      %c0_47 = arith.constant 0 : index
      %75 = vector.load %arg6[%c17, %c0_47] : memref<18x64xf32, #tpu.memory_space<vmem>>, vector<1x64xf32>
      tpu.vector_store %arg6[%c17, %c0_47], %73 {strides = array<i32>} : memref<18x64xf32, #tpu.memory_space<vmem>>, vector<1x64xf32>,
      %c0_48 = arith.constant 0 : index
      %c0_49 = arith.constant 0 : index
      %c0_50 = arith.constant 0 : index
      %c0_51 = arith.constant 0 : index
      %76 = vector.load %arg2[%c0_48, %c0_49, %c0_50, %c0_51] : memref<1x4x16x16xf32, #tpu.memory_space<vmem>>, vector<1x1x16x16xf32>
      %77 = vector.shape_cast %76 : vector<1x1x16x16xf32> to vector<16x16xf32>
      %c1_52 = arith.constant 1 : index
      %c0_53 = arith.constant 0 : index
      %78 = vector.load %arg6[%c1_52, %c0_53] : memref<18x64xf32, #tpu.memory_space<vmem>>, vector<16x16xf32>
      tpu.vector_store %arg6[%c1_52, %c0_53], %77 {strides = array<i32>} : memref<18x64xf32, #tpu.memory_space<vmem>>, vector<16x16xf32>,
      %c0_54 = arith.constant 0 : index
      %c1_55 = arith.constant 1 : index
      %c0_56 = arith.constant 0 : index
      %c0_57 = arith.constant 0 : index
      %79 = vector.load %arg2[%c0_54, %c1_55, %c0_56, %c0_57] : memref<1x4x16x16xf32, #tpu.memory_space<vmem>>, vector<1x1x16x16xf32>
      %80 = vector.shape_cast %79 : vector<1x1x16x16xf32> to vector<16x16xf32>
      %c1_58 = arith.constant 1 : index
      %c16 = arith.constant 16 : index
      %81 = vector.load %arg6[%c1_58, %c16] : memref<18x64xf32, #tpu.memory_space<vmem>>, vector<16x16xf32>
      tpu.vector_store %arg6[%c1_58, %c16], %80 {strides = array<i32>} : memref<18x64xf32, #tpu.memory_space<vmem>>, vector<16x16xf32>,
      %c0_59 = arith.constant 0 : index
      %c2_60 = arith.constant 2 : index
      %c0_61 = arith.constant 0 : index
      %c0_62 = arith.constant 0 : index
      %82 = vector.load %arg2[%c0_59, %c2_60, %c0_61, %c0_62] : memref<1x4x16x16xf32, #tpu.memory_space<vmem>>, vector<1x1x16x16xf32>
      %83 = vector.shape_cast %82 : vector<1x1x16x16xf32> to vector<16x16xf32>
      %c1_63 = arith.constant 1 : index
      %c32 = arith.constant 32 : index
      %84 = vector.load %arg6[%c1_63, %c32] : memref<18x64xf32, #tpu.memory_space<vmem>>, vector<16x16xf32>
      tpu.vector_store %arg6[%c1_63, %c32], %83 {strides = array<i32>} : memref<18x64xf32, #tpu.memory_space<vmem>>, vector<16x16xf32>,
      %c0_64 = arith.constant 0 : index
      %c3_65 = arith.constant 3 : index
      %c0_66 = arith.constant 0 : index
      %c0_67 = arith.constant 0 : index
      %85 = vector.load %arg2[%c0_64, %c3_65, %c0_66, %c0_67] : memref<1x4x16x16xf32, #tpu.memory_space<vmem>>, vector<1x1x16x16xf32>
      %86 = vector.shape_cast %85 : vector<1x1x16x16xf32> to vector<16x16xf32>
      %c1_68 = arith.constant 1 : index
      %c48 = arith.constant 48 : index
      %87 = vector.load %arg6[%c1_68, %c48] : memref<18x64xf32, #tpu.memory_space<vmem>>, vector<16x16xf32>
      tpu.vector_store %arg6[%c1_68, %c48], %86 {strides = array<i32>} : memref<18x64xf32, #tpu.memory_space<vmem>>, vector<16x16xf32>,
    } else {
    }
    %c16_i32 = arith.constant 16 : i32
    %3 = arith.muli %arg1, %c16_i32 : i32
    %4 = tpu.assume_multiple %3, 16 : i32
    %cst = arith.constant 0.000000e+00 : f32
    %5 = vector.broadcast %cst : f32 to vector<16x128xf32>
    %c0_i32_1 = arith.constant 0 : i32
    %6 = arith.addi %4, %c0_i32_1 : i32
    %7 = arith.index_cast %6 : i32 to index
    %c0 = arith.constant 0 : index
    %8 = vector.load %arg6[%7, %c0] : memref<18x64xf32, #tpu.memory_space<vmem>>, vector<16x64xf32>
    %9 = arith.truncf %8 : vector<16x64xf32> to vector<16x64xbf16>
    %c0_2 = arith.constant 0 : index
    %c0_3 = arith.constant 0 : index
    %c0_4 = arith.constant 0 : index
    %10 = vector.load %arg3[%c0_2, %c0_3, %c0_4] : memref<3x64x128xbf16, #tpu.memory_space<vmem>>, vector<1x64x128xbf16>
    %11 = vector.shape_cast %10 : vector<1x64x128xbf16> to vector<64x128xbf16>
    %cst_5 = arith.constant dense<0.000000e+00> : vector<16x128xf32>
    %12 = tpu.matmul %9, %11, %cst_5 {dimension_numbers = #tpu.dot_dimension_numbers<[1], [0], [0], [1], [0, 0, 1, 1], [], []>} : vector<16x64xbf16>, vector<64x128xbf16>, vector<16x128xf32> -> vector<16x128xf32>
    %13 = arith.addf %5, %12 : vector<16x128xf32>
    %c1_i32 = arith.constant 1 : i32
    %14 = arith.addi %4, %c1_i32 : i32
    %15 = arith.index_cast %14 : i32 to index
    %c0_6 = arith.constant 0 : index
    %16 = vector.load %arg6[%15, %c0_6] : memref<18x64xf32, #tpu.memory_space<vmem>>, vector<16x64xf32>
    %17 = arith.truncf %16 : vector<16x64xf32> to vector<16x64xbf16>
    %c1 = arith.constant 1 : index
    %c0_7 = arith.constant 0 : index
    %c0_8 = arith.constant 0 : index
    %18 = vector.load %arg3[%c1, %c0_7, %c0_8] : memref<3x64x128xbf16, #tpu.memory_space<vmem>>, vector<1x64x128xbf16>
    %19 = vector.shape_cast %18 : vector<1x64x128xbf16> to vector<64x128xbf16>
    %cst_9 = arith.constant dense<0.000000e+00> : vector<16x128xf32>
    %20 = tpu.matmul %17, %19, %cst_9 {dimension_numbers = #tpu.dot_dimension_numbers<[1], [0], [0], [1], [0, 0, 1, 1], [], []>} : vector<16x64xbf16>, vector<64x128xbf16>, vector<16x128xf32> -> vector<16x128xf32>
    %21 = arith.addf %13, %20 : vector<16x128xf32>
    %c2_i32 = arith.constant 2 : i32
    %22 = arith.addi %4, %c2_i32 : i32
    %23 = arith.index_cast %22 : i32 to index
    %c0_10 = arith.constant 0 : index
    %24 = vector.load %arg6[%23, %c0_10] : memref<18x64xf32, #tpu.memory_space<vmem>>, vector<16x64xf32>
    %25 = arith.truncf %24 : vector<16x64xf32> to vector<16x64xbf16>
    %c2 = arith.constant 2 : index
    %c0_11 = arith.constant 0 : index
    %c0_12 = arith.constant 0 : index
    %26 = vector.load %arg3[%c2, %c0_11, %c0_12] : memref<3x64x128xbf16, #tpu.memory_space<vmem>>, vector<1x64x128xbf16>
    %27 = vector.shape_cast %26 : vector<1x64x128xbf16> to vector<64x128xbf16>
    %cst_13 = arith.constant dense<0.000000e+00> : vector<16x128xf32>
    %28 = tpu.matmul %25, %27, %cst_13 {dimension_numbers = #tpu.dot_dimension_numbers<[1], [0], [0], [1], [0, 0, 1, 1], [], []>} : vector<16x64xbf16>, vector<64x128xbf16>, vector<16x128xf32> -> vector<16x128xf32>
    %29 = arith.addf %21, %28 : vector<16x128xf32>
    %c0_14 = arith.constant 0 : index
    %c0_15 = arith.constant 0 : index
    %30 = vector.load %arg4[%c0_14, %c0_15] : memref<1x128xf32, #tpu.memory_space<vmem>>, vector<1x128xf32>
    %31 = vector.shape_cast %30 : vector<1x128xf32> to vector<128xf32>
    %32 = vector.shape_cast %31 : vector<128xf32> to vector<1x128xf32>
    %33 = vector.broadcast %32 : vector<1x128xf32> to vector<16x128xf32>
    %34 = arith.addf %29, %33 : vector<16x128xf32>
    %35 = arith.negf %34 : vector<16x128xf32>
    %36 = math.exp %35 : vector<16x128xf32>
    %cst_16 = arith.constant 1.000000e+00 : f32
    %37 = vector.broadcast %cst_16 : f32 to vector<16x128xf32>
    %38 = arith.addf %37, %36 : vector<16x128xf32>
    %39 = arith.divf %37, %38 : vector<16x128xf32>
    %40 = arith.mulf %34, %39 : vector<16x128xf32>
    %41 = vector.extract_strided_slice %40 {offsets = [0, 0], sizes = [16, 16], strides = [1, 1]} : vector<16x128xf32> to vector<16x16xf32>
    %c0_17 = arith.constant 0 : index
    %c0_18 = arith.constant 0 : index
    %c0_19 = arith.constant 0 : index
    %c0_20 = arith.constant 0 : index
    %42 = vector.load %arg5[%c0_17, %c0_18, %c0_19, %c0_20] : memref<1x8x16x16xf32, #tpu.memory_space<vmem>>, vector<1x1x16x16xf32>
    %43 = vector.shape_cast %42 : vector<1x1x16x16xf32> to vector<16x16xf32>
    %44 = vector.shape_cast %41 : vector<16x16xf32> to vector<1x1x16x16xf32>
    tpu.vector_store %arg5[%c0_17, %c0_18, %c0_19, %c0_20], %44 {strides = array<i32>} : memref<1x8x16x16xf32, #tpu.memory_space<vmem>>, vector<1x1x16x16xf32>,
    %45 = vector.extract_strided_slice %40 {offsets = [0, 16], sizes = [16, 16], strides = [1, 1]} : vector<16x128xf32> to vector<16x16xf32>
    %c0_21 = arith.constant 0 : index
    %c1_22 = arith.constant 1 : index
    %c0_23 = arith.constant 0 : index
    %c0_24 = arith.constant 0 : index
    %46 = vector.load %arg5[%c0_21, %c1_22, %c0_23, %c0_24] : memref<1x8x16x16xf32, #tpu.memory_space<vmem>>, vector<1x1x16x16xf32>
    %47 = vector.shape_cast %46 : vector<1x1x16x16xf32> to vector<16x16xf32>
    %48 = vector.shape_cast %45 : vector<16x16xf32> to vector<1x1x16x16xf32>
    tpu.vector_store %arg5[%c0_21, %c1_22, %c0_23, %c0_24], %48 {strides = array<i32>} : memref<1x8x16x16xf32, #tpu.memory_space<vmem>>, vector<1x1x16x16xf32>,
    %49 = vector.extract_strided_slice %40 {offsets = [0, 32], sizes = [16, 16], strides = [1, 1]} : vector<16x128xf32> to vector<16x16xf32>
    %c0_25 = arith.constant 0 : index
    %c2_26 = arith.constant 2 : index
    %c0_27 = arith.constant 0 : index
    %c0_28 = arith.constant 0 : index
    %50 = vector.load %arg5[%c0_25, %c2_26, %c0_27, %c0_28] : memref<1x8x16x16xf32, #tpu.memory_space<vmem>>, vector<1x1x16x16xf32>
    %51 = vector.shape_cast %50 : vector<1x1x16x16xf32> to vector<16x16xf32>
    %52 = vector.shape_cast %49 : vector<16x16xf32> to vector<1x1x16x16xf32>
    tpu.vector_store %arg5[%c0_25, %c2_26, %c0_27, %c0_28], %52 {strides = array<i32>} : memref<1x8x16x16xf32, #tpu.memory_space<vmem>>, vector<1x1x16x16xf32>,
    %53 = vector.extract_strided_slice %40 {offsets = [0, 48], sizes = [16, 16], strides = [1, 1]} : vector<16x128xf32> to vector<16x16xf32>
    %c0_29 = arith.constant 0 : index
    %c3 = arith.constant 3 : index
    %c0_30 = arith.constant 0 : index
    %c0_31 = arith.constant 0 : index
    %54 = vector.load %arg5[%c0_29, %c3, %c0_30, %c0_31] : memref<1x8x16x16xf32, #tpu.memory_space<vmem>>, vector<1x1x16x16xf32>
    %55 = vector.shape_cast %54 : vector<1x1x16x16xf32> to vector<16x16xf32>
    %56 = vector.shape_cast %53 : vector<16x16xf32> to vector<1x1x16x16xf32>
    tpu.vector_store %arg5[%c0_29, %c3, %c0_30, %c0_31], %56 {strides = array<i32>} : memref<1x8x16x16xf32, #tpu.memory_space<vmem>>, vector<1x1x16x16xf32>,
    %57 = vector.extract_strided_slice %40 {offsets = [0, 64], sizes = [16, 16], strides = [1, 1]} : vector<16x128xf32> to vector<16x16xf32>
    %c0_32 = arith.constant 0 : index
    %c4 = arith.constant 4 : index
    %c0_33 = arith.constant 0 : index
    %c0_34 = arith.constant 0 : index
    %58 = vector.load %arg5[%c0_32, %c4, %c0_33, %c0_34] : memref<1x8x16x16xf32, #tpu.memory_space<vmem>>, vector<1x1x16x16xf32>
    %59 = vector.shape_cast %58 : vector<1x1x16x16xf32> to vector<16x16xf32>
    %60 = vector.shape_cast %57 : vector<16x16xf32> to vector<1x1x16x16xf32>
    tpu.vector_store %arg5[%c0_32, %c4, %c0_33, %c0_34], %60 {strides = array<i32>} : memref<1x8x16x16xf32, #tpu.memory_space<vmem>>, vector<1x1x16x16xf32>,
    %61 = vector.extract_strided_slice %40 {offsets = [0, 80], sizes = [16, 16], strides = [1, 1]} : vector<16x128xf32> to vector<16x16xf32>
    %c0_35 = arith.constant 0 : index
    %c5 = arith.constant 5 : index
    %c0_36 = arith.constant 0 : index
    %c0_37 = arith.constant 0 : index
    %62 = vector.load %arg5[%c0_35, %c5, %c0_36, %c0_37] : memref<1x8x16x16xf32, #tpu.memory_space<vmem>>, vector<1x1x16x16xf32>
    %63 = vector.shape_cast %62 : vector<1x1x16x16xf32> to vector<16x16xf32>
    %64 = vector.shape_cast %61 : vector<16x16xf32> to vector<1x1x16x16xf32>
    tpu.vector_store %arg5[%c0_35, %c5, %c0_36, %c0_37], %64 {strides = array<i32>} : memref<1x8x16x16xf32, #tpu.memory_space<vmem>>, vector<1x1x16x16xf32>,
    %65 = vector.extract_strided_slice %40 {offsets = [0, 96], sizes = [16, 16], strides = [1, 1]} : vector<16x128xf32> to vector<16x16xf32>
    %c0_38 = arith.constant 0 : index
    %c6 = arith.constant 6 : index
    %c0_39 = arith.constant 0 : index
    %c0_40 = arith.constant 0 : index
    %66 = vector.load %arg5[%c0_38, %c6, %c0_39, %c0_40] : memref<1x8x16x16xf32, #tpu.memory_space<vmem>>, vector<1x1x16x16xf32>
    %67 = vector.shape_cast %66 : vector<1x1x16x16xf32> to vector<16x16xf32>
    %68 = vector.shape_cast %65 : vector<16x16xf32> to vector<1x1x16x16xf32>
    tpu.vector_store %arg5[%c0_38, %c6, %c0_39, %c0_40], %68 {strides = array<i32>} : memref<1x8x16x16xf32, #tpu.memory_space<vmem>>, vector<1x1x16x16xf32>,
    %69 = vector.extract_strided_slice %40 {offsets = [0, 112], sizes = [16, 16], strides = [1, 1]} : vector<16x128xf32> to vector<16x16xf32>
    %c0_41 = arith.constant 0 : index
    %c7 = arith.constant 7 : index
    %c0_42 = arith.constant 0 : index
    %c0_43 = arith.constant 0 : index
    %70 = vector.load %arg5[%c0_41, %c7, %c0_42, %c0_43] : memref<1x8x16x16xf32, #tpu.memory_space<vmem>>, vector<1x1x16x16xf32>
    %71 = vector.shape_cast %70 : vector<1x1x16x16xf32> to vector<16x16xf32>
    %72 = vector.shape_cast %69 : vector<16x16xf32> to vector<1x1x16x16xf32>
    tpu.vector_store %arg5[%c0_41, %c7, %c0_42, %c0_43], %72 {strides = array<i32>} : memref<1x8x16x16xf32, #tpu.memory_space<vmem>>, vector<1x1x16x16xf32>,
    return
  }
  func.func @transform_0(%arg0: i32, %arg1: i32) -> (i32, i32, i32, i32) {
    %c0_i32 = arith.constant 0 : i32
    %c0_i32_0 = arith.constant 0 : i32
    %c0_i32_1 = arith.constant 0 : i32
    %c0_i32_2 = arith.constant 0 : i32
    return %arg0, %c0_i32, %c0_i32_0, %c0_i32_1 : i32, i32, i32, i32
  }
  func.func @transform_1(%arg0: i32, %arg1: i32) -> (i32, i32, i32) {
    %c0_i32 = arith.constant 0 : i32
    %c0_i32_0 = arith.constant 0 : i32
    %c0_i32_1 = arith.constant 0 : i32
    %c0_i32_2 = arith.constant 0 : i32
    return %c0_i32, %c0_i32_0, %c0_i32_1 : i32, i32, i32
  }
  func.func @transform_2(%arg0: i32, %arg1: i32) -> (i32, i32) {
    %c0_i32 = arith.constant 0 : i32
    %c0_i32_0 = arith.constant 0 : i32
    %c0_i32_1 = arith.constant 0 : i32
    return %c0_i32, %c0_i32_0 : i32, i32
  }
  func.func @transform_3(%arg0: i32, %arg1: i32) -> (i32, i32, i32, i32) {
    %c0_i32 = arith.constant 0 : i32
    %c0_i32_0 = arith.constant 0 : i32
    %c0_i32_1 = arith.constant 0 : i32
    return %arg0, %c0_i32, %arg1, %c0_i32_0 : i32, i32, i32, i32
  }
}

</mosaic_0001>

<llo_original>
// kernel: tpu_custom_call.1
$region0: #{tpu_custom_call.1}
  #allocation0 [shape = 'u32[]', space=smem, size = 0x4, offset = 0x4, fixed_abs, tag = 'smem constant byte address 0x4 - core index']
  #allocation1 [shape = 'u32[144,128]{1,0:T(1,128)}', space=vmem, size = 0x12000, scoped, tag = 'internal scratch']
  #allocation2 [shape = 'f32[18,64]{1,0:T(8,128)}', space=vmem, size = 0x3000, scoped, tag = 'scratch operand']
  %s0 = inlined_call_operand.hbm [shape: f32[2,4,16,16], index: 0, kind: input, shape index: {}]
  %s1 = inlined_call_operand.hbm [shape: bf16[3,64,128], index: 1, kind: input, shape index: {}]
  %s2 = inlined_call_operand.vmem [shape: f32[1,128], index: 2, kind: input, shape index: {}]
  %s3 = inlined_call_operand.hbm [shape: f32[2,8,16,16], index: 3, kind: output, shape index: {}]
  %s4 = sld [smem:[#allocation0]]
  $region57: #{tpu_custom_call.1} parent=0
    _
  %s6 = ssub.s32 1, %s4
  %s7 = scalar_select 0, %s6, %s4
  $region1: #{tpu_custom_call.1} parent=0
    #allocation3 [shape = 'u8[65536]{0}', space=vmem, size = 0x10000, scoped, tag = 'input window, operand 0']
    #allocation4 [shape = 's32[2]{0}', space=sflag, size = 0x8, scoped, tag = 'scoped memory for tpu_custom_call.1']
    #allocation5 [shape = 's32[2]{0}', space=sflag, size = 0x8, scoped, tag = 'scoped memory for tpu_custom_call.1']
    #allocation6 [shape = 'u8[49152]{0}', space=vmem, size = 0xc000, scoped, tag = 'input window, operand 1, single buffered']
    #allocation7 [shape = 's32[1]{0}', space=sflag, size = 0x4, scoped, tag = 'scoped memory for tpu_custom_call.1']
    #allocation8 [shape = 'u8[131072]{0}', space=vmem, size = 0x20000, scoped, tag = 'output window, operand 0']
    %8 = vsyncpa [#allocation4], 0
    %s9 = scalar_lea.sflag [#allocation4], 1
    %10 = vsyncpa %s9, 0
    %11 = vsyncpa [#allocation7], 0
    %12 = vsyncpa [#allocation5], 0
    %s13 = scalar_lea.sflag [#allocation5], 1
    %14 = vsyncpa %s13, 0
    loop: start=0, step=1, limit=4
    $region2: #{tpu_custom_call.1} parent=1 // loop_pre_header
      _
    $region3: #{tpu_custom_call.1} parent=1 // loop_header
      %s16 = sphi 0, %s20
      %p17 = scmp.ge.s32.totalorder %s16, 4
      %s23 = sphi 0, %s35
      %s24 = sphi 0, %s31
      %s25 = sphi 0, %s23
      %s26 = sphi 0, %s24
      %s27 = sphi 0, %s25
      %s28 = sphi 0, %s26
      %s38 = sphi 0, %s40
      %s41 = sphi 0, %s38
      %s42 = sphi 0, %s41
      %s58 = sphi 0, %s42
      %s62 = sphi 0, %s62
      %s64 = sphi 0, %s62
      %s65 = sphi 0, %s64
      %s79 = sphi 0, %s65
      %s83 = sphi 0, %s83
      %s85 = sphi 0, %s83
      %s86 = sphi 0, %s85
      %s100 = sphi 0, %s86
      %s108 = sphi 0, %s110
      %s111 = sphi 0, %s108
      %s112 = sphi 0, %s111
      %s128 = sphi 0, %s112
    $region4: #{tpu_custom_call.1} parent=1 // loop_header_branch
      %19 = sbr.rel (%p17) target = $region8
    $region5: #{tpu_custom_call.1} parent=1 // loop_body
      %s21 = ssub.s32 %s16, 1
      %s22 = ssub.s32 %s16, 2
      %s29 = sadd.s32 1, %s24
      %p30 = scmp.ge.s32.totalorder %s29, 1
      %s31 = scalar_select %p30, 0, %s29
      %s32 = sadd.s32 1, %s23
      %s33 = scalar_select %p30, %s32, %s23
      %p34 = scmp.ge.s32.totalorder %s33, 2
      %s35 = scalar_select %p34, 0, %s33
      %s36 = ssub.s32 %s23, %s35
      %p37 = scmp.eq.s32.totalorder %s36, 0
      %s39 = sadd.s32 %s38, 1
      %s40 = scalar_select %p37, %s38, %s39
      %p43 = pneg %p37
      %p44 = scmp.eq.s32.totalorder %s16, 1
      %p45 = por %p43, %p44
      %p46 = scmp.ne.s32.totalorder %s38, %s41
      %p47 = scmp.eq.s32.totalorder %s16, 0
      %p48 = por %p46, %p47
      %p49 = scmp.ne.s32.totalorder %s38, %s41
      %p50 = scmp.eq.s32.totalorder %s21, 1
      %p51 = por %p49, %p50
      %p52 = scmp.ne.s32.totalorder %s41, %s42
      %p53 = scmp.eq.s32.totalorder %s21, 0
      %p54 = por %p52, %p53
      %p55 = scmp.ne.s32.totalorder %s41, %s42
      %p56 = scmp.eq.s32.totalorder %s22, 1
      %p57 = por %p55, %p56
      %p59 = scmp.ne.s32.totalorder %s42, %s58
      %p60 = scmp.eq.s32.totalorder %s22, 0
      %p61 = por %p59, %p60
      %s63 = sadd.s32 %s62, 1
      %p66 = scmp.eq.s32.totalorder %s16, 1
      %p67 = scmp.ne.s32.totalorder %s62, %s64
      %p68 = scmp.eq.s32.totalorder %s16, 0
      %p69 = por %p67, %p68
      %p70 = scmp.ne.s32.totalorder %s62, %s64
      %p71 = scmp.eq.s32.totalorder %s21, 1
      %p72 = por %p70, %p71
      %p73 = scmp.ne.s32.totalorder %s64, %s65
      %p74 = scmp.eq.s32.totalorder %s21, 0
      %p75 = por %p73, %p74
      %p76 = scmp.ne.s32.totalorder %s64, %s65
      %p77 = scmp.eq.s32.totalorder %s22, 1
      %p78 = por %p76, %p77
      %p80 = scmp.ne.s32.totalorder %s65, %s79
      %p81 = scmp.eq.s32.totalorder %s22, 0
      %p82 = por %p80, %p81
      %s84 = sadd.s32 %s83, 1
      %p87 = scmp.eq.s32.totalorder %s16, 1
      %p88 = scmp.ne.s32.totalorder %s83, %s85
      %p89 = scmp.eq.s32.totalorder %s16, 0
      %p90 = por %p88, %p89
      %p91 = scmp.ne.s32.totalorder %s83, %s85
      %p92 = scmp.eq.s32.totalorder %s21, 1
      %p93 = por %p91, %p92
      %p94 = scmp.ne.s32.totalorder %s85, %s86
      %p95 = scmp.eq.s32.totalorder %s21, 0
      %p96 = por %p94, %p95
      %p97 = scmp.ne.s32.totalorder %s85, %s86
      %p98 = scmp.eq.s32.totalorder %s22, 1
      %p99 = por %p97, %p98
      %p101 = scmp.ne.s32.totalorder %s86, %s100
      %p102 = scmp.eq.s32.totalorder %s22, 0
      %p103 = por %p101, %p102
      %s104 = ssub.s32 %s23, %s35
      %s105 = ssub.s32 %s24, %s31
      %s106 = sor.u32 %s104, %s105
      %p107 = scmp.eq.s32.totalorder %s106, 0
      %s109 = sadd.s32 %s108, 1
      %s110 = scalar_select %p107, %s108, %s109
      %p113 = pneg %p107
      %p114 = scmp.eq.s32.totalorder %s16, 1
      %p115 = por %p113, %p114
      %p116 = scmp.ne.s32.totalorder %s108, %s111
      %p117 = scmp.eq.s32.totalorder %s16, 0
      %p118 = por %p116, %p117
      %p119 = scmp.ne.s32.totalorder %s108, %s111
      %p120 = scmp.eq.s32.totalorder %s21, 1
      %p121 = por %p119, %p120
      %p122 = scmp.ne.s32.totalorder %s111, %s112
      %p123 = scmp.eq.s32.totalorder %s21, 0
      %p124 = por %p122, %p123
      %p125 = scmp.ne.s32.totalorder %s111, %s112
      %p126 = scmp.eq.s32.totalorder %s22, 1
      %p127 = por %p125, %p126
      %p129 = scmp.ne.s32.totalorder %s112, %s128
      %p130 = scmp.eq.s32.totalorder %s22, 0
      %p131 = por %p129, %p130
      %p132 = scmp.le.s32.totalorder 1, %s16
      %p133 = scmp.lt.s32.totalorder %s16, 3
      %p134 = pnand %p132, %p133
      %p135 = pneg %p134
      // Predicated region
      $region9: #{tpu_custom_call.1} parent=5 // pred_check
        _
      $region10: #{tpu_custom_call.1} parent=5 // pred_check_branch
        %137 = sbr.rel (%p134) target = $region12
      $region11: #{tpu_custom_call.1} parent=5 // pred_region
        %s138 = ssub.s32 %s16, 1
        // Predicated region
        $region13: #{tpu_custom_call.1} parent=11 // pred_check
          %p139 = pneg %p75
        $region14: #{tpu_custom_call.1} parent=11 // pred_check_branch
          %141 = sbr.rel (%p139) target = $region16
        $region15: #{tpu_custom_call.1} parent=11 // pred_region
          %s143 = ssub.s32 1536, 1536
          %144 = vsyncadd [#allocation7], %s143
          %s145 = sshll.u32 [#allocation6], 4
          %s146 = int_to_ptr.vmem [resolvable:$true] %s145
          %151 = dma.hbm_to_vmem [thread:$0]  %s1, 1536, %s146, [#allocation7], 64, 64, 4
        $region16: #{tpu_custom_call.1} parent=11 // pred_fallthru
          _
        // Predicated region
        $region17: #{tpu_custom_call.1} parent=11 // pred_check
          %p152 = pneg %p96
        $region18: #{tpu_custom_call.1} parent=11 // pred_check_branch
          %154 = sbr.rel (%p152) target = $region20
        $region19: #{tpu_custom_call.1} parent=11 // pred_region
          _
        $region20: #{tpu_custom_call.1} parent=11 // pred_fallthru
          _
      $region12: #{tpu_custom_call.1} parent=5 // pred_fallthru
        _
      %p155 = scmp.lt.s32.totalorder %s16, 2
      // Predicated region
      $region21: #{tpu_custom_call.1} parent=5 // pred_check
        %p156 = pneg %p155
      $region22: #{tpu_custom_call.1} parent=5 // pred_check_branch
        %158 = sbr.rel (%p156) target = $region24
      $region23: #{tpu_custom_call.1} parent=5 // pred_region
        // Predicated region
        $region25: #{tpu_custom_call.1} parent=23 // pred_check
          %p159 = pneg %p48
        $region26: #{tpu_custom_call.1} parent=23 // pred_check_branch
          %161 = sbr.rel (%p159) target = $region28
        $region27: #{tpu_custom_call.1} parent=23 // pred_region
          %s162 = sand.u32 %s38, 1
          %s163 = scalar_lea.sflag [#allocation4], %s162
          %s164 = sand.u32 %s38, 1
          %s165 = smul.addr %s164, 64
          %s166 = scalar_lea.vmem [#allocation3], %s165
          %s168 = ssub.s32 1024, 1024
          %169 = vsyncadd %s163, %s168
          %s170 = smul.addr %s23, 8
          %s171 = smul.addr %s170, 128
          %s172 = scalar_lea.hbm %s0, %s171
          %s173 = sshll.u32 %s166, 4
          %s174 = int_to_ptr.vmem [resolvable:$true] %s173
          %179 = dma.hbm_to_vmem [thread:$0]  %s172, 1024, %s174, %s163, 128, 128, 8
        $region28: #{tpu_custom_call.1} parent=23 // pred_fallthru
          _
      $region24: #{tpu_custom_call.1} parent=5 // pred_fallthru
        _
      %p180 = scmp.le.s32.totalorder 1, %s16
      %p181 = scmp.lt.s32.totalorder %s16, 3
      %p182 = pnand %p180, %p181
      %p183 = pneg %p182
      // Predicated region
      $region29: #{tpu_custom_call.1} parent=5 // pred_check
        _
      $region30: #{tpu_custom_call.1} parent=5 // pred_check_branch
        %185 = sbr.rel (%p182) target = $region32
      $region31: #{tpu_custom_call.1} parent=5 // pred_region
        %s186 = ssub.s32 %s16, 1
        %s187 = sand.u32 %s41, 1
        %s188 = scalar_lea.sflag [#allocation4], %s187
        %s189 = sand.u32 %s41, 1
        %s190 = smul.addr %s189, 64
        %s191 = scalar_lea.vmem [#allocation3], %s190
        // Predicated region
        $region33: #{tpu_custom_call.1} parent=31 // pred_check
          %p192 = pneg %p54
        $region34: #{tpu_custom_call.1} parent=31 // pred_check_branch
          %194 = sbr.rel (%p192) target = $region36
        $region35: #{tpu_custom_call.1} parent=31 // pred_region
          %195 = dma.done %s188, 1024
        $region36: #{tpu_custom_call.1} parent=31 // pred_fallthru
          _
        // Predicated region
        $region37: #{tpu_custom_call.1} parent=31 // pred_check
          %p196 = pneg %p75
        $region38: #{tpu_custom_call.1} parent=31 // pred_check_branch
          %198 = sbr.rel (%p196) target = $region40
        $region39: #{tpu_custom_call.1} parent=31 // pred_region
          %199 = dma.done [#allocation7], 1536
        $region40: #{tpu_custom_call.1} parent=31 // pred_fallthru
          _
        %s200 = sand.u32 %s41, 1
        %s201 = scalar_lea.sflag [#allocation4], %s200
        %s202 = sand.u32 %s41, 1
        %s203 = smul.addr %s202, 64
        %s204 = scalar_lea.vmem [#allocation3], %s203
        %p205 = pneg %p54
        %p206 = pneg %p51
        %p207 = pneg %p75
        %p208 = pneg %p72
        %p209 = pneg %p96
        %p210 = pneg %p93
        %p211 = pneg %p124
        %p212 = pneg %p121
        %s213 = sand.u32 %s111, 1
        %s214 = scalar_lea.sflag [#allocation5], %s213
        %s215 = sand.u32 %s111, 1
        %s216 = smul.addr %s215, 128
        %s217 = scalar_lea.vmem [#allocation8], %s216
        %s218 = smul.u32 2, %s26
        %p220 = scmp.eq.s32.totalorder %s26, 0
        // Predicated region
        $region41: #{tpu_custom_call.1} parent=31 // pred_check
          %p221 = pneg %p220
        $region42: #{tpu_custom_call.1} parent=31 // pred_check_branch
          %223 = sbr.rel (%p221) target = $region44
        $region43: #{tpu_custom_call.1} parent=31 // pred_region
          %vm224 = vcmask 516096
          %225 = vst.msk [vmem:[#allocation2] sm:$0x1] %vm224, 0.0
          %226 = vst.msk [vmem:[#allocation2 + $0x11] sm:$0x1] %vm224, 0.0
          %v227 = vld [vmem:[%s191] sm:$0xff]
          %v228 = vld [vmem:[%s191 + $0x8] sm:$0xff]
          %vm229 = vcmask 130048
          %230 = vst.msk [vmem:[#allocation2 + $0x1] sm:$0xff] %vm229, %v227
          %231 = vst.msk [vmem:[#allocation2 + $0x9] sm:$0xff] %vm229, %v228
          %s232 = scalar_lea.vmem %s191, 16 [#allocation3]
          %v233 = vld [vmem:[%s232] sm:$0xff]
          %v234 = vld [vmem:[%s232 + $0x8] sm:$0xff]
          %237 = vrot.lane.b32.xlu0 %v233, 16
          %v238 = vpop.permute.xlu0 %237
          %239 = vrot.lane.b32.xlu0 %v234, 16
          %v240 = vpop.permute.xlu0 %239
          %vm243 = vcmask 261248
          %244 = vst.msk [vmem:[#allocation2 + $0x1] sm:$0xff] %vm243, %v238
          %245 = vst.msk [vmem:[#allocation2 + $0x9] sm:$0xff] %vm243, %v240
          %s246 = scalar_lea.vmem %s191, 32 [#allocation3]
          %v247 = vld [vmem:[%s246] sm:$0xff]
          %v248 = vld [vmem:[%s246 + $0x8] sm:$0xff]
          %251 = vrot.lane.b32.xlu0 %v247, 32
          %v252 = vpop.permute.xlu0 %251
          %253 = vrot.lane.b32.xlu0 %v248, 32
          %v254 = vpop.permute.xlu0 %253
          %vm257 = vcmask 392448
          %258 = vst.msk [vmem:[#allocation2 + $0x1] sm:$0xff] %vm257, %v252
          %259 = vst.msk [vmem:[#allocation2 + $0x9] sm:$0xff] %vm257, %v254
          %s260 = scalar_lea.vmem %s191, 48 [#allocation3]
          %v261 = vld [vmem:[%s260] sm:$0xff]
          %v262 = vld [vmem:[%s260 + $0x8] sm:$0xff]
          %265 = vrot.lane.b32.xlu0 %v261, 48
          %v266 = vpop.permute.xlu0 %265
          %267 = vrot.lane.b32.xlu0 %v262, 48
          %v268 = vpop.permute.xlu0 %267
          %vm271 = vcmask 523648
          %272 = vst.msk [vmem:[#allocation2 + $0x1] sm:$0xff] %vm271, %v266
          %273 = vst.msk [vmem:[#allocation2 + $0x9] sm:$0xff] %vm271, %v268
        $region44: #{tpu_custom_call.1} parent=31 // pred_fallthru
          _
        %s274 = smul.u32 %s26, 16
        %s275 = scalar_lea.vmem [#allocation2], %s274
        %v276 = vld [vmem:[%s275] sm:$0xff]
        %v277 = vld [vmem:[%s275 + $0x8] sm:$0xff]
        %v278 = vpack.c.bf16 %v277, %v276
        %v279 = vld [vmem:[#allocation6] sm:$0xf]
        %v280 = vld [vmem:[#allocation6 + $0x4] sm:$0xf]
        %v281 = vld [vmem:[#allocation6 + $0x8] sm:$0xf]
        %v282 = vld [vmem:[#allocation6 + $0xc] sm:$0xf]
        %v283 = vld [vmem:[#allocation6 + $0x10] sm:$0xf]
        %v284 = vld [vmem:[#allocation6 + $0x14] sm:$0xf]
        %v285 = vld [vmem:[#allocation6 + $0x18] sm:$0xf]
        %v286 = vld [vmem:[#allocation6 + $0x1c] sm:$0xf]
        %s287 = sadd.s32 %s274, 1
        %s288 = scalar_lea.vmem [#allocation2], %s287
        %v289 = vld [vmem:[%s288] sm:$0xff]
        %v290 = vld [vmem:[%s288 + $0x8] sm:$0xff]
        %v291 = vpack.c.bf16 %v290, %v289
        %s292 = scalar_lea.vmem [#allocation6], 32
        %v293 = vld [vmem:[%s292] sm:$0xf]
        %v294 = vld [vmem:[%s292 + $0x4] sm:$0xf]
        %v295 = vld [vmem:[%s292 + $0x8] sm:$0xf]
        %v296 = vld [vmem:[%s292 + $0xc] sm:$0xf]
        %v297 = vld [vmem:[%s292 + $0x10] sm:$0xf]
        %v298 = vld [vmem:[%s292 + $0x14] sm:$0xf]
        %v299 = vld [vmem:[%s292 + $0x18] sm:$0xf]
        %v300 = vld [vmem:[%s292 + $0x1c] sm:$0xf]
        %v309 = vunpack.c.l.b16 %v293
        %v310 = vunpack.c.l.b16 %v294
        %v311 = vunpack.c.l.b16 %v295
        %v312 = vunpack.c.l.b16 %v296
        %v313 = vunpack.c.l.b16 %v297
        %v314 = vunpack.c.l.b16 %v298
        %v315 = vunpack.c.l.b16 %v299
        %v316 = vunpack.c.l.b16 %v300
        %v317 = vpack.c.b16 %v310, %v309
        %v318 = vpack.c.b16 %v312, %v311
        %v319 = vpack.c.b16 %v314, %v313
        %v320 = vpack.c.b16 %v316, %v315
        %vm325 = vcmask 523264
        %v327 = vsel %vm325, %v291, 0
        %329 = vmatprep.subr.bf16.mxu0 0
        %330 = vmatpush1.bf16.msra.mxu0 %v317
        %331 = vmatprep.subr.bf16.mxu0 0
        %332 = vmatpush1.bf16.msra.mxu0 %v318
        %333 = vmatprep.subr.bf16.mxu0 0
        %334 = vmatpush1.bf16.msra.mxu0 %v319
        %335 = vmatprep.subr.bf16.mxu0 0
        %336 = vmatpush1.bf16.msra.mxu0 %v320
        %337 = vmatprep.subr.bf16.mxu0 0
        %338 = vmatpush1.bf16.msra.mxu0 0
        %339 = vmatprep.subr.bf16.mxu0 0
        %340 = vmatpush1.bf16.msra.mxu0 0
        %341 = vmatprep.subr.bf16.mxu0 0
        %342 = vmatpush1.bf16.msra.mxu0 0
        %343 = vmatprep.subr.bf16.mxu0 0
        %344 = vmatpush1.bf16.msra.mxu0 0
        %345 = vmatprep.subr.bf16.mxu0 0
        %346 = vmatpush1.bf16.msra.mxu0 0
        %347 = vmatprep.subr.bf16.mxu0 0
        %348 = vmatpush1.bf16.msra.mxu0 0
        %349 = vmatprep.subr.bf16.mxu0 0
        %350 = vmatpush1.bf16.msra.mxu0 0
        %351 = vmatprep.subr.bf16.mxu0 0
        %352 = vmatpush1.bf16.msra.mxu0 0
        %353 = vmatprep.subr.bf16.mxu0 0
        %354 = vmatpush1.bf16.msra.mxu0 0
        %355 = vmatprep.subr.bf16.mxu0 0
        %356 = vmatpush1.bf16.msra.mxu0 0
        %357 = vmatprep.subr.bf16.mxu0 0
        %358 = vmatpush1.bf16.msra.mxu0 0
        %359 = vmatprep.subr.bf16.mxu0 0
        %360 = vmatpush1.bf16.msra.mxu0 0
        %361 = vmatprep.mubr.bf16.mxu0 0
        %362 = vmatmul.mubr.bf16.gmra.mrb[0].mxu0 %v327
        %v363 = vpop.f32.mrb[0].mxu0
        %v364 = vadd.f32 0.0, %v363
        %v365 = vpop.f32.mrb[0].mxu0
        %v366 = vpop.f32.mrb[0].mxu0
        %v367 = vadd.f32 0.0, %v366
        %v368 = vpop.f32.mrb[0].mxu0
        %369 = vdwg.mxu0
        %v378 = vunpack.c.l.b16 %v279
        %v379 = vunpack.c.l.b16 %v280
        %v380 = vunpack.c.l.b16 %v281
        %v381 = vunpack.c.l.b16 %v282
        %v382 = vunpack.c.l.b16 %v283
        %v383 = vunpack.c.l.b16 %v284
        %v384 = vunpack.c.l.b16 %v285
        %v385 = vunpack.c.l.b16 %v286
        %v386 = vpack.c.b16 %v379, %v378
        %v387 = vpack.c.b16 %v381, %v380
        %v388 = vpack.c.b16 %v383, %v382
        %v389 = vpack.c.b16 %v385, %v384
        %v395 = vsel %vm325, %v278, 0
        %397 = vmatprep.subr.bf16.mxu0 0
        %398 = vmatpush1.bf16.msra.mxu0 %v386
        %399 = vmatprep.subr.bf16.mxu0 0
        %400 = vmatpush1.bf16.msra.mxu0 %v387
        %401 = vmatprep.subr.bf16.mxu0 0
        %402 = vmatpush1.bf16.msra.mxu0 %v388
        %403 = vmatprep.subr.bf16.mxu0 0
        %404 = vmatpush1.bf16.msra.mxu0 %v389
        %405 = vmatprep.subr.bf16.mxu0 0
        %406 = vmatpush1.bf16.msra.mxu0 0
        %407 = vmatprep.subr.bf16.mxu0 0
        %408 = vmatpush1.bf16.msra.mxu0 0
        %409 = vmatprep.subr.bf16.mxu0 0
        %410 = vmatpush1.bf16.msra.mxu0 0
        %411 = vmatprep.subr.bf16.mxu0 0
        %412 = vmatpush1.bf16.msra.mxu0 0
        %413 = vmatprep.subr.bf16.mxu0 0
        %414 = vmatpush1.bf16.msra.mxu0 0
        %415 = vmatprep.subr.bf16.mxu0 0
        %416 = vmatpush1.bf16.msra.mxu0 0
        %417 = vmatprep.subr.bf16.mxu0 0
        %418 = vmatpush1.bf16.msra.mxu0 0
        %419 = vmatprep.subr.bf16.mxu0 0
        %420 = vmatpush1.bf16.msra.mxu0 0
        %421 = vmatprep.subr.bf16.mxu0 0
        %422 = vmatpush1.bf16.msra.mxu0 0
        %423 = vmatprep.subr.bf16.mxu0 0
        %424 = vmatpush1.bf16.msra.mxu0 0
        %425 = vmatprep.subr.bf16.mxu0 0
        %426 = vmatpush1.bf16.msra.mxu0 0
        %427 = vmatprep.subr.bf16.mxu0 0
        %428 = vmatpush1.bf16.msra.mxu0 0
        %429 = vmatprep.mubr.bf16.mxu0 0
        %430 = vmatmul.mubr.bf16.gmra.mrb[0].mxu0 %v395
        %v431 = vpop.f32.mrb[0].mxu0
        %v432 = vadd.f32 %v364, %v431
        %v433 = vpop.f32.mrb[0].mxu0
        %v434 = vpop.f32.mrb[0].mxu0
        %v435 = vadd.f32 %v367, %v434
        %v436 = vpop.f32.mrb[0].mxu0
        %437 = vdwg.mxu0
        %s438 = sadd.s32 %s274, 2
        %s439 = scalar_lea.vmem [#allocation2], %s438
        %v440 = vld [vmem:[%s439] sm:$0xff]
        %v441 = vld [vmem:[%s439 + $0x8] sm:$0xff]
        %v442 = vpack.c.bf16 %v441, %v440
        %s443 = scalar_lea.vmem [#allocation6], 64
        %v444 = vld [vmem:[%s443] sm:$0xf]
        %v445 = vld [vmem:[%s443 + $0x4] sm:$0xf]
        %v446 = vld [vmem:[%s443 + $0x8] sm:$0xf]
        %v447 = vld [vmem:[%s443 + $0xc] sm:$0xf]
        %v448 = vld [vmem:[%s443 + $0x10] sm:$0xf]
        %v449 = vld [vmem:[%s443 + $0x14] sm:$0xf]
        %v450 = vld [vmem:[%s443 + $0x18] sm:$0xf]
        %v451 = vld [vmem:[%s443 + $0x1c] sm:$0xf]
        %v460 = vunpack.c.l.b16 %v444
        %v461 = vunpack.c.l.b16 %v445
        %v462 = vunpack.c.l.b16 %v446
        %v463 = vunpack.c.l.b16 %v447
        %v464 = vunpack.c.l.b16 %v448
        %v465 = vunpack.c.l.b16 %v449
        %v466 = vunpack.c.l.b16 %v450
        %v467 = vunpack.c.l.b16 %v451
        %v468 = vpack.c.b16 %v461, %v460
        %v469 = vpack.c.b16 %v463, %v462
        %v470 = vpack.c.b16 %v465, %v464
        %v471 = vpack.c.b16 %v467, %v466
        %v477 = vsel %vm325, %v442, 0
        %479 = vmatprep.subr.bf16.mxu0 0
        %480 = vmatpush1.bf16.msra.mxu0 %v468
        %481 = vmatprep.subr.bf16.mxu0 0
        %482 = vmatpush1.bf16.msra.mxu0 %v469
        %483 = vmatprep.subr.bf16.mxu0 0
        %484 = vmatpush1.bf16.msra.mxu0 %v470
        %485 = vmatprep.subr.bf16.mxu0 0
        %486 = vmatpush1.bf16.msra.mxu0 %v471
        %487 = vmatprep.subr.bf16.mxu0 0
        %488 = vmatpush1.bf16.msra.mxu0 0
        %489 = vmatprep.subr.bf16.mxu0 0
        %490 = vmatpush1.bf16.msra.mxu0 0
        %491 = vmatprep.subr.bf16.mxu0 0
        %492 = vmatpush1.bf16.msra.mxu0 0
        %493 = vmatprep.subr.bf16.mxu0 0
        %494 = vmatpush1.bf16.msra.mxu0 0
        %495 = vmatprep.subr.bf16.mxu0 0
        %496 = vmatpush1.bf16.msra.mxu0 0
        %497 = vmatprep.subr.bf16.mxu0 0
        %498 = vmatpush1.bf16.msra.mxu0 0
        %499 = vmatprep.subr.bf16.mxu0 0
        %500 = vmatpush1.bf16.msra.mxu0 0
        %501 = vmatprep.subr.bf16.mxu0 0
        %502 = vmatpush1.bf16.msra.mxu0 0
        %503 = vmatprep.subr.bf16.mxu0 0
        %504 = vmatpush1.bf16.msra.mxu0 0
        %505 = vmatprep.subr.bf16.mxu0 0
        %506 = vmatpush1.bf16.msra.mxu0 0
        %507 = vmatprep.subr.bf16.mxu0 0
        %508 = vmatpush1.bf16.msra.mxu0 0
        %509 = vmatprep.subr.bf16.mxu0 0
        %510 = vmatpush1.bf16.msra.mxu0 0
        %511 = vmatprep.mubr.bf16.mxu0 0
        %512 = vmatmul.mubr.bf16.gmra.mrb[0].mxu0 %v477
        %v513 = vpop.f32.mrb[0].mxu0
        %v514 = vadd.f32 0.0, %v513
        %v515 = vpop.f32.mrb[0].mxu0
        %v516 = vpop.f32.mrb[0].mxu0
        %v517 = vadd.f32 0.0, %v516
        %v518 = vpop.f32.mrb[0].mxu0
        %519 = vdwg.mxu0
        %v520 = vadd.f32 %v432, %v514
        %v521 = vadd.f32 %v435, %v517
        %v522 = vld [vmem:[%s2] sm:$0x1]
        %v524 = vlaneseq
        %v525 = vshrl.u32 %v524, 7
        %v526 = vsub.s32 0, %v525
        %v527 = vrot.slane %v522, %v526
        %v529 = vadd.f32 %v520, %v527
        %v530 = vadd.f32 %v521, %v527
        %v531 = vxor.u32 %v529, 2147483648
        %v532 = vxor.u32 %v530, 2147483648
        %v533 = vmul.f32 %v531, 1.442695
        %v534 = vpow.pop %v533
        %v535 = vmul.f32 %v532, 1.442695
        %v536 = vpow.pop %v535
        %v537 = vadd.f32 %v534, 1.0
        %v538 = vadd.f32 %v536, 1.0
        %v539 = vrcp.pop %v537
        %v540 = vmul.f32 1.0, %v539
        %v541 = vrcp.pop %v538
        %v542 = vmul.f32 1.0, %v541
        %v543 = vmul.f32 %v529, %v540
        %v544 = vmul.f32 %v530, %v542
        %vm545 = vcmask 130048
        %546 = vst.msk [vmem:[%s217] sm:$0xff] %vm545, %v543
        %547 = vst.msk [vmem:[%s217 + $0x8] sm:$0xff] %vm545, %v544
        %550 = vrot.lane.b32.xlu0 %v543, 112
        %v551 = vpop.permute.xlu0 %550
        %552 = vrot.lane.b32.xlu0 %v544, 112
        %v553 = vpop.permute.xlu0 %552
        %s556 = scalar_lea.vmem %s217, 16 [#allocation8]
        %557 = vst.msk [vmem:[%s556] sm:$0xff] %vm545, %v551
        %558 = vst.msk [vmem:[%s556 + $0x8] sm:$0xff] %vm545, %v553
        %559 = vrot.lane.b32.xlu0 %v543, 96
        %v560 = vpop.permute.xlu0 %559
        %561 = vrot.lane.b32.xlu0 %v544, 96
        %v562 = vpop.permute.xlu0 %561
        %s565 = scalar_lea.vmem %s217, 32 [#allocation8]
        %566 = vst.msk [vmem:[%s565] sm:$0xff] %vm545, %v560
        %567 = vst.msk [vmem:[%s565 + $0x8] sm:$0xff] %vm545, %v562
        %568 = vrot.lane.b32.xlu0 %v543, 80
        %v569 = vpop.permute.xlu0 %568
        %570 = vrot.lane.b32.xlu0 %v544, 80
        %v571 = vpop.permute.xlu0 %570
        %s574 = scalar_lea.vmem %s217, 48 [#allocation8]
        %575 = vst.msk [vmem:[%s574] sm:$0xff] %vm545, %v569
        %576 = vst.msk [vmem:[%s574 + $0x8] sm:$0xff] %vm545, %v571
        %577 = vrot.lane.b32.xlu0 %v543, 64
        %v578 = vpop.permute.xlu0 %577
        %579 = vrot.lane.b32.xlu0 %v544, 64
        %v580 = vpop.permute.xlu0 %579
        %s583 = scalar_lea.vmem %s217, 64 [#allocation8]
        %584 = vst.msk [vmem:[%s583] sm:$0xff] %vm545, %v578
        %585 = vst.msk [vmem:[%s583 + $0x8] sm:$0xff] %vm545, %v580
        %586 = vrot.lane.b32.xlu0 %v543, 48
        %v587 = vpop.permute.xlu0 %586
        %588 = vrot.lane.b32.xlu0 %v544, 48
        %v589 = vpop.permute.xlu0 %588
        %s592 = scalar_lea.vmem %s217, 80 [#allocation8]
        %593 = vst.msk [vmem:[%s592] sm:$0xff] %vm545, %v587
        %594 = vst.msk [vmem:[%s592 + $0x8] sm:$0xff] %vm545, %v589
        %595 = vrot.lane.b32.xlu0 %v543, 32
        %v596 = vpop.permute.xlu0 %595
        %597 = vrot.lane.b32.xlu0 %v544, 32
        %v598 = vpop.permute.xlu0 %597
        %s601 = scalar_lea.vmem %s217, 96 [#allocation8]
        %602 = vst.msk [vmem:[%s601] sm:$0xff] %vm545, %v596
        %603 = vst.msk [vmem:[%s601 + $0x8] sm:$0xff] %vm545, %v598
        %604 = vrot.lane.b32.xlu0 %v543, 16
        %v605 = vpop.permute.xlu0 %604
        %606 = vrot.lane.b32.xlu0 %v544, 16
        %v607 = vpop.permute.xlu0 %606
        %s610 = scalar_lea.vmem %s217, 112 [#allocation8]
        %611 = vst.msk [vmem:[%s610] sm:$0xff] %vm545, %v605
        %612 = vst.msk [vmem:[%s610 + $0x8] sm:$0xff] %vm545, %v607
        %s613 = sand.u32 %s111, 1
        %s614 = scalar_lea.sflag [#allocation5], %s613
        %s615 = sand.u32 %s111, 1
        %s616 = smul.addr %s615, 128
        %s617 = scalar_lea.vmem [#allocation8], %s616
        // Predicated region
        $region45: #{tpu_custom_call.1} parent=31 // pred_check
          %p618 = pneg %p121
        $region46: #{tpu_custom_call.1} parent=31 // pred_check_branch
          %620 = sbr.rel (%p618) target = $region48
        $region47: #{tpu_custom_call.1} parent=31 // pred_region
          %s621 = smul.u32 2, %s26
          %s623 = ssub.s32 2048, 2048
          %624 = vsyncadd %s614, %s623
          %s625 = smul.addr %s25, 16
          %s626 = sadd.s32 %s621, %s625
          %s627 = smul.addr %s626, 128
          %s628 = scalar_lea.hbm %s3, %s627
          %s629 = sshll.u32 %s617, 4
          %s630 = int_to_ptr.vmem [resolvable:$true] %s629
          %635 = dma.vmem_to_hbm [thread:$0]  %s630, 2048, %s628, %s614, 128, 128, 8
        $region48: #{tpu_custom_call.1} parent=31 // pred_fallthru
          _
      $region32: #{tpu_custom_call.1} parent=5 // pred_fallthru
        _
      %p636 = scmp.le.s32.totalorder 2, %s16
      // Predicated region
      $region49: #{tpu_custom_call.1} parent=5 // pred_check
        %p637 = pneg %p636
      $region50: #{tpu_custom_call.1} parent=5 // pred_check_branch
        %639 = sbr.rel (%p637) target = $region52
      $region51: #{tpu_custom_call.1} parent=5 // pred_region
        %s640 = ssub.s32 %s16, 2
        // Predicated region
        $region53: #{tpu_custom_call.1} parent=51 // pred_check
          %p641 = pneg %p127
        $region54: #{tpu_custom_call.1} parent=51 // pred_check_branch
          %643 = sbr.rel (%p641) target = $region56
        $region55: #{tpu_custom_call.1} parent=51 // pred_region
          %s644 = sand.u32 %s112, 1
          %s645 = scalar_lea.sflag [#allocation5], %s644
          %s646 = sand.u32 %s112, 1
          %s647 = smul.addr %s646, 128
          %s648 = scalar_lea.vmem [#allocation8], %s647
          %649 = dma.done %s645, 2048
        $region56: #{tpu_custom_call.1} parent=51 // pred_fallthru
          _
      $region52: #{tpu_custom_call.1} parent=5 // pred_fallthru
        _
    $region6: #{tpu_custom_call.1} parent=1 // loop_footer
      %s20 = sadd.s32 1, %s16
    $region7: #{tpu_custom_call.1} parent=1 // loop_footer_branch
      %15 = sbr.rel target = $region3
    $region8: #{tpu_custom_call.1} parent=1 // loop_exit
      _
    %650 = vsyncpa [#allocation4], 1
    %s651 = scalar_lea.sflag [#allocation4], 1
    %652 = vsyncpa %s651, 1
    %653 = vsyncpa [#allocation7], 1
    %654 = vsyncpa [#allocation5], 1
    %s655 = scalar_lea.sflag [#allocation5], 1
    %656 = vsyncpa %s655, 1

</llo_original>
